<compile_context>
chip_gen: v7x
topology: tpu7x:2x2x1
jax: 0.10.0
libtpu: 0.0.40
codegen_flags: <defaults>
</compile_context>

<pallas_src>
import functools

import jax
import jax.numpy as jnp
from jax.experimental import pallas as pl
from jax.experimental.pallas import tpu as pltpu

LANE = 128  # pad output channels to this so output stores are lane-dense


def _round_up(x, m):
    return (x + m - 1) // m * m


# ----------------------------------------------------------------------------
# Kernel: 3x3 conv (+ folded BN bias) (+ fused shortcut) (+ ReLU).
# One batch element per grid step.
#   taps_in_kernel=True : x_ref is the spatially padded image
#                         (1, Ho+2, Wo+2, Cin); 9 taps built from VMEM slices.
#   taps_in_kernel=False: x_ref is a prebuilt patch matrix (1, Ho*Wo, 9*Cin)
#                         (wrapper-side im2col; only used for strided conv1).
#   res_mode:
#     None       : no shortcut
#     "identity" : r_ref holds the (Cp-channel-padded) bf16 input, added as-is
#     "project"  : r_ref holds the strided bf16 input (1, Ho, Wo, Cin) and
#                  wsc_ref the (Cin, Cp) 1x1 weights, fused as a second dot.
# ----------------------------------------------------------------------------
def _conv_block_kernel(x_ref, w_ref, b_ref, *rest, Ho, Wo, taps_in_kernel,
                       apply_relu, pad_out, res_mode):
    o_ref = rest[-1]
    Cp = o_ref.shape[-1]
    M = Ho * Wo

    if taps_in_kernel:
        x = x_ref[0]                                    # (Ho+2, Wo+2, Cin)
        cin = x.shape[-1]
        acc = jnp.zeros((M, Cp), jnp.float32)
        for kh in range(3):
            for kw in range(3):
                tap = x[kh:kh + Ho, kw:kw + Wo, :].reshape(M, cin)
                acc = acc + jnp.dot(tap, w_ref[kh * 3 + kw],
                                    preferred_element_type=jnp.float32)
    else:
        acc = jnp.dot(x_ref[0], w_ref[...],
                      preferred_element_type=jnp.float32)

    acc = acc + b_ref[...]                              # (1, Cp) broadcast

    if res_mode == "project":
        r_ref, wsc_ref = rest[0], rest[1]
        r = r_ref[0].reshape(M, r_ref.shape[-1])        # bf16 (M, Cin)
        acc = acc + jnp.dot(r, wsc_ref[...],
                            preferred_element_type=jnp.float32)
    elif res_mode == "identity":
        r_ref = rest[0]
        acc = acc + r_ref[0].reshape(M, Cp).astype(jnp.float32)

    if apply_relu:
        acc = jnp.maximum(acc, 0.0)

    out = acc.astype(o_ref.dtype).reshape(Ho, Wo, Cp)
    if pad_out:
        # Emit a 1-pixel zero border so the next conv's in-kernel im2col can
        # consume this output directly (no wrapper-side pad pass).
        o_ref[0] = jnp.zeros(o_ref.shape[1:], o_ref.dtype)
        o_ref[0, 1:1 + Ho, 1:1 + Wo, :] = out
    else:
        o_ref[0] = out


def _conv_pallas(x, w, b, *, Ho, Wo, taps_in_kernel, apply_relu, pad_out,
                 res_mode=None, residual=None, wsc=None,
                 out_dtype=jnp.bfloat16):
    """Launch the fused conv kernel over grid=(N,)."""
    N = x.shape[0]
    Cp = int(w.shape[-1])
    Hop, Wop = (Ho + 2, Wo + 2) if pad_out else (Ho, Wo)
    M = Ho * Wo

    def batch_spec(arr):
        trail = (0,) * (arr.ndim - 1)
        return pl.BlockSpec((1,) + tuple(arr.shape[1:]),
                            lambda n, _t=trail: (n,) + _t)

    def resident_spec(arr):
        zeros = (0,) * arr.ndim
        return pl.BlockSpec(tuple(arr.shape), lambda n, _z=zeros: _z)

    args = [x, w, b]
    in_specs = [batch_spec(x), resident_spec(w), resident_spec(b)]
    if res_mode is not None:
        args.append(residual)
        in_specs.append(batch_spec(residual))
    if res_mode == "project":
        args.append(wsc)
        in_specs.append(resident_spec(wsc))

    kernel = functools.partial(
        _conv_block_kernel, Ho=Ho, Wo=Wo, taps_in_kernel=taps_in_kernel,
        apply_relu=apply_relu, pad_out=pad_out, res_mode=res_mode)

    # --- cost estimate & VMEM budget -----------------------------------------
    def nbytes(shape, dt):
        n = 1
        for s in shape:
            n *= int(s)
        return n * jnp.dtype(dt).itemsize

    kc = int(w.shape[0]) * (int(w.shape[1]) if w.ndim == 3 else 1)
    flops = 2 * N * M * kc * Cp
    bytes_accessed = (nbytes(x.shape, x.dtype) + nbytes(w.shape, w.dtype)
                      + nbytes(b.shape, b.dtype)
                      + nbytes((N, Hop, Wop, Cp), out_dtype))
    if residual is not None:
        bytes_accessed += nbytes(residual.shape, residual.dtype)
    if wsc is not None:
        flops += 2 * N * M * int(wsc.shape[0]) * Cp
        bytes_accessed += nbytes(wsc.shape, wsc.dtype)

    x_blk = nbytes((1,) + tuple(x.shape[1:]), x.dtype)
    o_blk = nbytes((1, Hop, Wop, Cp), out_dtype)
    work = (2 * x_blk + 2 * o_blk + nbytes(w.shape, w.dtype)
            + nbytes(b.shape, b.dtype) + nbytes((M, Cp), jnp.float32)
            + 2 * nbytes((M, int(x.shape[-1])), jnp.bfloat16))
    if residual is not None:
        work += 2 * nbytes((1,) + tuple(residual.shape[1:]), residual.dtype)
    if wsc is not None:
        work += nbytes(wsc.shape, wsc.dtype)
    vmem_limit = int(min(max(2 * work + (4 << 20), 32 << 20), 64 << 20))

    return pl.pallas_call(
        kernel,
        out_shape=jax.ShapeDtypeStruct((N, Hop, Wop, Cp), out_dtype),
        grid=(N,),
        in_specs=in_specs,
        out_specs=pl.BlockSpec((1, Hop, Wop, Cp), lambda n: (n, 0, 0, 0)),
        compiler_params=pltpu.CompilerParams(
            dimension_semantics=("parallel",),
            vmem_limit_bytes=vmem_limit),
        cost_estimate=pl.CostEstimate(flops=int(flops), transcendentals=0,
                                      bytes_accessed=int(bytes_accessed)),
    )(*args)


# ----------------------------------------------------------------------------
# Wrapper-side im2col (only for strided convs): single fused concat.
# ----------------------------------------------------------------------------
def _im2col_nhwc(x, ksize, stride, padding):
    """x: (N, H, W, C) -> (N, Ho*Wo, ksize*ksize*C) patch tensor (one concat,
    tap-major / channel-minor column order), plus (Ho, Wo)."""
    N, H, W, C = x.shape
    Ho = (H + 2 * padding - ksize) // stride + 1
    Wo = (W + 2 * padding - ksize) // stride + 1
    xp = jnp.pad(x, ((0, 0), (padding, padding), (padding, padding), (0, 0)))
    cols = [xp[:, kh:kh + stride * Ho:stride, kw:kw + stride * Wo:stride, :]
            for kh in range(ksize) for kw in range(ksize)]
    patches = jnp.concatenate(cols, axis=-1).reshape(
        N, Ho * Wo, ksize * ksize * C)
    return patches, (Ho, Wo)


# ----------------------------------------------------------------------------
# Parameter folding / padding
# ----------------------------------------------------------------------------
def _fold_bn(gamma, beta, mean, var, eps=1e-5):
    scale = gamma / jnp.sqrt(var + eps)
    return scale, beta - mean * scale


def _prep_conv_bn(w_taps, gamma, beta, mean, var, *, cin_pad, cout_pad):
    """(K, Cin, Cout) f32 weights + BN stats -> (K, cin_pad, cout_pad) bf16
    weights with the BN scale folded in, plus the (Cout,) f32 folded bias."""
    K, Cin, Cout = w_taps.shape
    scale, bias = _fold_bn(gamma, beta, mean, var)
    w = w_taps * scale[None, None, :]
    wp = jnp.zeros((K, cin_pad, cout_pad), jnp.float32).at[:, :Cin, :Cout].set(w)
    return wp.astype(jnp.bfloat16), bias


def init_params(key, in_channels, out_channels, stride):
    """Deterministic synthetic raw parameters (no checkpoint load)."""
    def bn(k, c):
        k1, k2, k3, k4 = jax.random.split(k, 4)
        gamma = 1.0 + 0.1 * jax.random.normal(k1, (c,), jnp.float32)
        beta = 0.1 * jax.random.normal(k2, (c,), jnp.float32)
        mean = 0.1 * jax.random.normal(k3, (c,), jnp.float32)
        var = 0.5 + jax.nn.softplus(jax.random.normal(k4, (c,), jnp.float32))
        return gamma, beta, mean, var

    keys = jax.random.split(key, 6)
    raw = {
        "w1": 0.1 * jax.random.normal(
            keys[0], (9, in_channels, out_channels), jnp.float32),
        "bn1": bn(keys[1], out_channels),
        "w2": 0.1 * jax.random.normal(
            keys[2], (9, out_channels, out_channels), jnp.float32),
        "bn2": bn(keys[3], out_channels),
    }
    if stride != 1 or in_channels != out_channels:
        raw["wsc"] = 0.1 * jax.random.normal(
            keys[4], (1, in_channels, out_channels), jnp.float32)
        raw["bnsc"] = bn(keys[5], out_channels)
    return raw


def prepare_params(raw, in_channels, out_channels):
    """Fold BN into conv weights, pad output channels to a lane multiple,
    cast to bf16.  The projection-BN bias is fused into the conv2 bias."""
    Cout = out_channels
    Cp = _round_up(Cout, LANE)
    p = {"cout": Cout, "cp": Cp}
    p["w1"], b1 = _prep_conv_bn(raw["w1"], *raw["bn1"],
                                cin_pad=in_channels, cout_pad=Cp)
    # conv2 consumes conv1's Cp-padded output -> pad its input-channel dim too.
    p["w2"], b2 = _prep_conv_bn(raw["w2"], *raw["bn2"],
                                cin_pad=Cp, cout_pad=Cp)
    p["b1"] = jnp.zeros((1, Cp), jnp.float32).at[0, :Cout].set(b1)
    if "wsc" in raw:
        wsc, bsc = _prep_conv_bn(raw["wsc"], *raw["bnsc"],
                                 cin_pad=in_channels, cout_pad=Cp)
        p["wsc"] = wsc.reshape(in_channels, Cp)      # (Cin, Cp) 1x1 weights
        b2 = b2 + bsc                                # fused into conv2 bias
    p["b2"] = jnp.zeros((1, Cp), jnp.float32).at[0, :Cout].set(b2)
    return p


# ----------------------------------------------------------------------------
# BasicBlock forward (NCHW in / NCHW out, matching the PyTorch module)
# ----------------------------------------------------------------------------
def basic_block_forward(x_nchw, p, stride):
    x = jnp.transpose(x_nchw, (0, 2, 3, 1))             # NCHW -> NHWC
    xb = x.astype(jnp.bfloat16)
    N, H, W, Cin = x.shape
    Cout, Cp = p["cout"], p["cp"]
    Ho = (H + 2 - 3) // stride + 1
    Wo = (W + 2 - 3) // stride + 1

    # ---- conv1 + bn1 + relu -> bf16 NHWC with a 1-px zero border ------------
    if stride == 1:
        xpad = jnp.pad(xb, ((0, 0), (1, 1), (1, 1), (0, 0)))
        h1 = _conv_pallas(xpad, p["w1"], p["b1"], Ho=Ho, Wo=Wo,
                          taps_in_kernel=True, apply_relu=True, pad_out=True,
                          out_dtype=jnp.bfloat16)
    else:
        # TODO(synk): in-kernel im2col for strided convs (phase split); the
        # wrapper-side patch matrix here only inflates traffic ~9/stride^2.
        patches1, _ = _im2col_nhwc(xb, 3, stride, 1)
        h1 = _conv_pallas(patches1, p["w1"].reshape(-1, Cp), p["b1"],
                          Ho=Ho, Wo=Wo, taps_in_kernel=False, apply_relu=True,
                          pad_out=True, out_dtype=jnp.bfloat16)

    # ---- conv2 + bn2 + shortcut + relu (single fused kernel) ----------------
    if "wsc" in p:
        xs = xb[:, ::stride, ::stride, :][:, :Ho, :Wo, :]   # 1x1-conv input
        out = _conv_pallas(h1, p["w2"], p["b2"], Ho=Ho, Wo=Wo,
                           taps_in_kernel=True, apply_relu=True, pad_out=False,
                           res_mode="project", residual=xs, wsc=p["wsc"],
                           out_dtype=jnp.float32)
    else:
        rid = jnp.pad(xb, ((0, 0), (0, 0), (0, 0), (0, Cp - Cin)))
        out = _conv_pallas(h1, p["w2"], p["b2"], Ho=Ho, Wo=Wo,
                           taps_in_kernel=True, apply_relu=True, pad_out=False,
                           res_mode="identity", residual=rid,
                           out_dtype=jnp.float32)

    out = out[..., :Cout]
    # Final output kept f32 NCHW to match the PyTorch module; when stacking
    # blocks one would stay NHWC/bf16 and skip this transpose + slice.
    return jnp.transpose(out, (0, 3, 1, 2))


# ----------------------------------------------------------------------------
# Pure-JAX reference (same folded bf16 weights / bf16 activation path, so the
# only deviation from the f32 PyTorch module is bf16 rounding).
# ----------------------------------------------------------------------------
def reference_forward(x_nchw, p, stride):
    x = jnp.transpose(x_nchw, (0, 2, 3, 1)).astype(jnp.float32)
    Cout, Cp = p["cout"], p["cp"]
    xb = x.astype(jnp.bfloat16).astype(jnp.float32)      # kernel's bf16 path

    def conv(inp, w3d, ks, s, pad):
        cin_pad = w3d.shape[-2]
        w = w3d.astype(jnp.float32).reshape(ks, ks, cin_pad, Cp)
        w = w[:, :, :inp.shape[-1], :Cout]
        return jax.lax.conv_general_dilated(
            inp, w, (s, s), ((pad, pad), (pad, pad)),
            dimension_numbers=("NHWC", "HWIO", "NHWC"),
            precision=jax.lax.Precision.HIGHEST)

    b1 = p["b1"][0, :Cout]
    b2 = p["b2"][0, :Cout]            # includes the projection-BN bias
    h1 = jax.nn.relu(conv(xb, p["w1"], 3, stride, 1) + b1)
    h1 = h1.astype(jnp.bfloat16).astype(jnp.float32)     # stored as bf16
    out = conv(h1, p["w2"], 3, 1, 1) + b2
    if "wsc" in p:
        sc = conv(xb, p["wsc"][None], 1, stride, 0)
    else:
        sc = xb
    out = jax.nn.relu(out + sc)
    return jnp.transpose(out, (0, 3, 1, 2))


def _check(name, out, ref, tol=3e-3):
    if not jnp.allclose(out, ref, atol=tol, rtol=tol):
        err = float(jnp.max(jnp.abs(out - ref)))
        raise AssertionError(f"{name}: max abs diff {err}")


if __name__ == "__main__":
    key = jax.random.PRNGKey(0)
    k1, k2, k3, k4 = jax.random.split(key, 4)

    # Config A: projection shortcut  -- BasicBlock(4, 8, stride=2)
    N, Cin, H, W, Cout, stride = 2, 4, 16, 16, 8, 2
    x = jax.random.normal(k1, (N, Cin, H, W), jnp.float32)
    params = prepare_params(init_params(k2, Cin, Cout, stride), Cin, Cout)
    out = jax.block_until_ready(basic_block_forward(x, params, stride))
    assert out.shape == (N, Cout, H // stride, W // stride), out.shape
    _check("projection block", out, reference_forward(x, params, stride))

    # Config B: identity shortcut    -- BasicBlock(8, 8, stride=1)
    C2 = 8
    x2 = jax.random.normal(k3, (N, C2, H, W), jnp.float32)
    params2 = prepare_params(init_params(k4, C2, C2, 1), C2, C2)
    out2 = jax.block_until_ready(basic_block_forward(x2, params2, 1))
    assert out2.shape == (N, C2, H, W), out2.shape
    _check("identity block", out2, reference_forward(x2, params2, 1))

    print("KERNEL_OK")
</pallas_src>

<mosaic_0001>
module attributes {stable_mosaic.version = 11 : i64} {
  func.func @_conv_block_kernel(%arg0: i32, %arg1: memref<1x64x36xbf16, #tpu.memory_space<vmem>>, %arg2: memref<36x128xbf16, #tpu.memory_space<vmem>>, %arg3: memref<1x128xf32, #tpu.memory_space<vmem>>, %arg4: memref<1x10x10x128xbf16, #tpu.memory_space<vmem>>) attributes {dimension_semantics = [#tpu.dimension_semantics<parallel>], iteration_bounds = array<i64: 2>, scalar_prefetch = 0 : i64, scratch_operands = 0 : i64, tpu.core_type = #tpu.core_type<tc>, window_params = [{transform_indices = @transform_0, window_bounds = array<i64: 1, 64, 36>}, {pipeline_mode = #tpu.pipeline_mode<synchronous>, transform_indices = @transform_1, window_bounds = array<i64: 36, 128>}, {pipeline_mode = #tpu.pipeline_mode<synchronous>, transform_indices = @transform_2, window_bounds = array<i64: 1, 128>}, {transform_indices = @transform_3, window_bounds = array<i64: 1, 10, 10, 128>}]} {
    %c0 = arith.constant 0 : index
    %c0_0 = arith.constant 0 : index
    %c0_1 = arith.constant 0 : index
    %0 = vector.load %arg1[%c0, %c0_0, %c0_1] : memref<1x64x36xbf16, #tpu.memory_space<vmem>>, vector<1x64x36xbf16>
    %1 = vector.shape_cast %0 : vector<1x64x36xbf16> to vector<64x36xbf16>
    %c0_2 = arith.constant 0 : index
    %c0_3 = arith.constant 0 : index
    %2 = vector.load %arg2[%c0_2, %c0_3] : memref<36x128xbf16, #tpu.memory_space<vmem>>, vector<36x128xbf16>
    %cst = arith.constant dense<0.000000e+00> : vector<64x128xf32>
    %3 = tpu.matmul %1, %2, %cst {dimension_numbers = #tpu.dot_dimension_numbers<[1], [0], [0], [1], [0, 0, 1, 1], [], []>} : vector<64x36xbf16>, vector<36x128xbf16>, vector<64x128xf32> -> vector<64x128xf32>
    %c0_4 = arith.constant 0 : index
    %c0_5 = arith.constant 0 : index
    %4 = vector.load %arg3[%c0_4, %c0_5] : memref<1x128xf32, #tpu.memory_space<vmem>>, vector<1x128xf32>
    %5 = vector.broadcast %4 : vector<1x128xf32> to vector<64x128xf32>
    %6 = arith.addf %3, %5 : vector<64x128xf32>
    %cst_6 = arith.constant 0.000000e+00 : f32
    %7 = vector.broadcast %cst_6 : f32 to vector<64x128xf32>
    %8 = arith.maximumf %6, %7 : vector<64x128xf32>
    %9 = arith.truncf %8 : vector<64x128xf32> to vector<64x128xbf16>
    %10 = vector.shape_cast %9 : vector<64x128xbf16> to vector<8x8x128xbf16>
    %cst_7 = arith.constant 0.000000e+00 : bf16
    %11 = vector.broadcast %cst_7 : bf16 to vector<10x10x128xbf16>
    %c0_8 = arith.constant 0 : index
    %c0_9 = arith.constant 0 : index
    %c0_10 = arith.constant 0 : index
    %c0_11 = arith.constant 0 : index
    %12 = vector.load %arg4[%c0_8, %c0_9, %c0_10, %c0_11] : memref<1x10x10x128xbf16, #tpu.memory_space<vmem>>, vector<1x10x10x128xbf16>
    %13 = vector.shape_cast %12 : vector<1x10x10x128xbf16> to vector<10x10x128xbf16>
    %14 = vector.shape_cast %11 : vector<10x10x128xbf16> to vector<1x10x10x128xbf16>
    tpu.vector_store %arg4[%c0_8, %c0_9, %c0_10, %c0_11], %14 {strides = array<i32>} : memref<1x10x10x128xbf16, #tpu.memory_space<vmem>>, vector<1x10x10x128xbf16>,
    %c0_12 = arith.constant 0 : index
    %c1 = arith.constant 1 : index
    %c1_13 = arith.constant 1 : index
    %c0_14 = arith.constant 0 : index
    %15 = vector.load %arg4[%c0_12, %c1, %c1_13, %c0_14] : memref<1x10x10x128xbf16, #tpu.memory_space<vmem>>, vector<1x8x8x128xbf16>
    %16 = vector.shape_cast %15 : vector<1x8x8x128xbf16> to vector<8x8x128xbf16>
    %17 = vector.shape_cast %10 : vector<8x8x128xbf16> to vector<1x8x8x128xbf16>
    tpu.vector_store %arg4[%c0_12, %c1, %c1_13, %c0_14], %17 {strides = array<i32>} : memref<1x10x10x128xbf16, #tpu.memory_space<vmem>>, vector<1x8x8x128xbf16>,
    return
  }
  func.func @transform_0(%arg0: i32) -> (i32, i32, i32) {
    %c0_i32 = arith.constant 0 : i32
    %c0_i32_0 = arith.constant 0 : i32
    %c0_i32_1 = arith.constant 0 : i32
    return %arg0, %c0_i32, %c0_i32_0 : i32, i32, i32
  }
  func.func @transform_1(%arg0: i32) -> (i32, i32) {
    %c0_i32 = arith.constant 0 : i32
    %c0_i32_0 = arith.constant 0 : i32
    %c0_i32_1 = arith.constant 0 : i32
    return %c0_i32, %c0_i32_0 : i32, i32
  }
  func.func @transform_2(%arg0: i32) -> (i32, i32) {
    %c0_i32 = arith.constant 0 : i32
    %c0_i32_0 = arith.constant 0 : i32
    %c0_i32_1 = arith.constant 0 : i32
    return %c0_i32, %c0_i32_0 : i32, i32
  }
  func.func @transform_3(%arg0: i32) -> (i32, i32, i32, i32) {
    %c0_i32 = arith.constant 0 : i32
    %c0_i32_0 = arith.constant 0 : i32
    %c0_i32_1 = arith.constant 0 : i32
    %c0_i32_2 = arith.constant 0 : i32
    return %arg0, %c0_i32, %c0_i32_0, %c0_i32_1 : i32, i32, i32, i32
  }
}

</mosaic_0001>

<llo_original>
// kernel: tpu_custom_call.1
$region0: #{tpu_custom_call.1}
  #allocation0 [shape = 'u32[]', space=smem, size = 0x4, offset = 0x4, fixed_abs, tag = 'smem constant byte address 0x4 - core index']
  #allocation1 [shape = 'u32[144,128]{1,0:T(1,128)}', space=vmem, size = 0x12000, scoped, tag = 'internal scratch']
  %s0 = inlined_call_operand.vmem [shape: bf16[2,64,36], index: 0, kind: input, shape index: {}]
  %s1 = inlined_call_operand.vmem [shape: bf16[36,128], index: 1, kind: input, shape index: {}]
  %s2 = inlined_call_operand.vmem [shape: f32[1,128], index: 2, kind: input, shape index: {}]
  %s3 = inlined_call_operand.vmem [shape: bf16[2,10,10,128], index: 3, kind: output, shape index: {}]
  %s4 = sld [smem:[#allocation0]]
  $region45: #{tpu_custom_call.1} parent=0
    _
  %s6 = ssub.s32 1, %s4
  %s7 = scalar_select 0, %s6, %s4
  loop: start=0, step=1, limit=4
  $region2: #{tpu_custom_call.1} parent=0 // loop_pre_header
    _
  $region3: #{tpu_custom_call.1} parent=0 // loop_header
    %s9 = sphi 0, %s13
    %p10 = scmp.ge.s32.totalorder %s9, 4
    %s19 = sphi 0, %s21
    %s22 = sphi 0, %s19
    %s23 = sphi 0, %s22
    %s39 = sphi 0, %s23
    %s43 = sphi 0, %s43
    %s45 = sphi 0, %s43
    %s46 = sphi 0, %s45
    %s60 = sphi 0, %s46
    %s64 = sphi 0, %s64
    %s66 = sphi 0, %s64
    %s67 = sphi 0, %s66
    %s81 = sphi 0, %s67
    %s87 = sphi 0, %s89
    %s90 = sphi 0, %s87
    %s91 = sphi 0, %s90
    %s107 = sphi 0, %s91
  $region4: #{tpu_custom_call.1} parent=0 // loop_header_branch
    %12 = sbr.rel (%p10) target = $region8
  $region5: #{tpu_custom_call.1} parent=0 // loop_body
    %s14 = ssub.s32 %s9, 1
    %s15 = ssub.s32 %s9, 2
    %s16 = sadd.s32 %s9, 1
    %s17 = ssub.s32 %s9, %s16
    %p18 = scmp.eq.s32.totalorder %s17, 0
    %s20 = sadd.s32 %s19, 1
    %s21 = scalar_select %p18, %s19, %s20
    %p24 = pneg %p18
    %p25 = scmp.eq.s32.totalorder %s9, 1
    %p26 = por %p24, %p25
    %p27 = scmp.ne.s32.totalorder %s19, %s22
    %p28 = scmp.eq.s32.totalorder %s9, 0
    %p29 = por %p27, %p28
    %p30 = scmp.ne.s32.totalorder %s19, %s22
    %p31 = scmp.eq.s32.totalorder %s14, 1
    %p32 = por %p30, %p31
    %p33 = scmp.ne.s32.totalorder %s22, %s23
    %p34 = scmp.eq.s32.totalorder %s14, 0
    %p35 = por %p33, %p34
    %p36 = scmp.ne.s32.totalorder %s22, %s23
    %p37 = scmp.eq.s32.totalorder %s15, 1
    %p38 = por %p36, %p37
    %p40 = scmp.ne.s32.totalorder %s23, %s39
    %p41 = scmp.eq.s32.totalorder %s15, 0
    %p42 = por %p40, %p41
    %s44 = sadd.s32 %s43, 1
    %p47 = scmp.eq.s32.totalorder %s9, 1
    %p48 = scmp.ne.s32.totalorder %s43, %s45
    %p49 = scmp.eq.s32.totalorder %s9, 0
    %p50 = por %p48, %p49
    %p51 = scmp.ne.s32.totalorder %s43, %s45
    %p52 = scmp.eq.s32.totalorder %s14, 1
    %p53 = por %p51, %p52
    %p54 = scmp.ne.s32.totalorder %s45, %s46
    %p55 = scmp.eq.s32.totalorder %s14, 0
    %p56 = por %p54, %p55
    %p57 = scmp.ne.s32.totalorder %s45, %s46
    %p58 = scmp.eq.s32.totalorder %s15, 1
    %p59 = por %p57, %p58
    %p61 = scmp.ne.s32.totalorder %s46, %s60
    %p62 = scmp.eq.s32.totalorder %s15, 0
    %p63 = por %p61, %p62
    %s65 = sadd.s32 %s64, 1
    %p68 = scmp.eq.s32.totalorder %s9, 1
    %p69 = scmp.ne.s32.totalorder %s64, %s66
    %p70 = scmp.eq.s32.totalorder %s9, 0
    %p71 = por %p69, %p70
    %p72 = scmp.ne.s32.totalorder %s64, %s66
    %p73 = scmp.eq.s32.totalorder %s14, 1
    %p74 = por %p72, %p73
    %p75 = scmp.ne.s32.totalorder %s66, %s67
    %p76 = scmp.eq.s32.totalorder %s14, 0
    %p77 = por %p75, %p76
    %p78 = scmp.ne.s32.totalorder %s66, %s67
    %p79 = scmp.eq.s32.totalorder %s15, 1
    %p80 = por %p78, %p79
    %p82 = scmp.ne.s32.totalorder %s67, %s81
    %p83 = scmp.eq.s32.totalorder %s15, 0
    %p84 = por %p82, %p83
    %s85 = ssub.s32 %s9, %s16
    %p86 = scmp.eq.s32.totalorder %s85, 0
    %s88 = sadd.s32 %s87, 1
    %s89 = scalar_select %p86, %s87, %s88
    %p92 = pneg %p86
    %p93 = scmp.eq.s32.totalorder %s9, 1
    %p94 = por %p92, %p93
    %p95 = scmp.ne.s32.totalorder %s87, %s90
    %p96 = scmp.eq.s32.totalorder %s9, 0
    %p97 = por %p95, %p96
    %p98 = scmp.ne.s32.totalorder %s87, %s90
    %p99 = scmp.eq.s32.totalorder %s14, 1
    %p100 = por %p98, %p99
    %p101 = scmp.ne.s32.totalorder %s90, %s91
    %p102 = scmp.eq.s32.totalorder %s14, 0
    %p103 = por %p101, %p102
    %p104 = scmp.ne.s32.totalorder %s90, %s91
    %p105 = scmp.eq.s32.totalorder %s15, 1
    %p106 = por %p104, %p105
    %p108 = scmp.ne.s32.totalorder %s91, %s107
    %p109 = scmp.eq.s32.totalorder %s15, 0
    %p110 = por %p108, %p109
    %p111 = scmp.le.s32.totalorder 1, %s9
    %p112 = scmp.lt.s32.totalorder %s9, 3
    %p113 = pnand %p111, %p112
    %p114 = pneg %p113
    // Predicated region
    $region9: #{tpu_custom_call.1} parent=5 // pred_check
      _
    $region10: #{tpu_custom_call.1} parent=5 // pred_check_branch
      %116 = sbr.rel (%p113) target = $region12
    $region11: #{tpu_custom_call.1} parent=5 // pred_region
      %s117 = ssub.s32 %s9, 1
      // Predicated region
      $region13: #{tpu_custom_call.1} parent=11 // pred_check
        %p118 = pneg %p56
      $region14: #{tpu_custom_call.1} parent=11 // pred_check_branch
        %120 = sbr.rel (%p118) target = $region16
      $region15: #{tpu_custom_call.1} parent=11 // pred_region
        _
      $region16: #{tpu_custom_call.1} parent=11 // pred_fallthru
        _
      // Predicated region
      $region17: #{tpu_custom_call.1} parent=11 // pred_check
        %p121 = pneg %p77
      $region18: #{tpu_custom_call.1} parent=11 // pred_check_branch
        %123 = sbr.rel (%p121) target = $region20
      $region19: #{tpu_custom_call.1} parent=11 // pred_region
        _
      $region20: #{tpu_custom_call.1} parent=11 // pred_fallthru
        _
    $region12: #{tpu_custom_call.1} parent=5 // pred_fallthru
      _
    %p124 = scmp.lt.s32.totalorder %s9, 2
    // Predicated region
    $region21: #{tpu_custom_call.1} parent=5 // pred_check
      %p125 = pneg %p124
    $region22: #{tpu_custom_call.1} parent=5 // pred_check_branch
      %127 = sbr.rel (%p125) target = $region24
    $region23: #{tpu_custom_call.1} parent=5 // pred_region
      // Predicated region
      $region25: #{tpu_custom_call.1} parent=23 // pred_check
        %p128 = pneg %p29
      $region26: #{tpu_custom_call.1} parent=23 // pred_check_branch
        %130 = sbr.rel (%p128) target = $region28
      $region27: #{tpu_custom_call.1} parent=23 // pred_region
        %p131 = scmp.lt.s32.totalorder %s9, 1
        %s132 = scalar_select %p131, %s9, 1
        %s133 = smul.addr %s132, 8
        %s134 = smul.addr %s133, 4
        %s135 = scalar_lea.vmem %s0, %s134
      $region28: #{tpu_custom_call.1} parent=23 // pred_fallthru
        _
    $region24: #{tpu_custom_call.1} parent=5 // pred_fallthru
      _
    %p136 = scmp.le.s32.totalorder 1, %s9
    %p137 = scmp.lt.s32.totalorder %s9, 3
    %p138 = pnand %p136, %p137
    %p139 = pneg %p138
    // Predicated region
    $region29: #{tpu_custom_call.1} parent=5 // pred_check
      _
    $region30: #{tpu_custom_call.1} parent=5 // pred_check_branch
      %141 = sbr.rel (%p138) target = $region32
    $region31: #{tpu_custom_call.1} parent=5 // pred_region
      %s142 = ssub.s32 %s9, 1
      %p143 = scmp.lt.s32.totalorder %s14, 1
      %s144 = scalar_select %p143, %s14, 1
      %s145 = smul.addr %s144, 8
      %s146 = smul.addr %s145, 4
      %s147 = scalar_lea.vmem %s0, %s146
      %p148 = pneg %p35
      %p149 = pneg %p32
      %p150 = pneg %p56
      %p151 = pneg %p53
      %p152 = pneg %p77
      %p153 = pneg %p74
      %p154 = pneg %p103
      %p155 = pneg %p100
      %p156 = scmp.lt.s32.totalorder %s14, 1
      %s157 = scalar_select %p156, %s14, 1
      %s158 = smul.addr %s157, 20
      %s159 = smul.addr %s158, 4
      %s160 = scalar_lea.vmem %s3, %s159
      %p161 = scmp.lt.s32.totalorder %s14, 1
      %s162 = scalar_select %p161, %s14, 1
      %s163 = smul.addr %s162, 8
      %s164 = smul.addr %s163, 4
      %s165 = scalar_lea.vmem %s0, %s164
      %p166 = scmp.lt.s32.totalorder %s14, 1
      %s167 = scalar_select %p166, %s14, 1
      %s168 = smul.addr %s167, 20
      %s169 = smul.addr %s168, 4
      %s170 = scalar_lea.vmem %s3, %s169
      %v172 = vld [vmem:[%s165] sm:$0xf]
      %v173 = vld [vmem:[%s165 + $0x4] sm:$0xf]
      %v174 = vld [vmem:[%s165 + $0x8] sm:$0xf]
      %v175 = vld [vmem:[%s165 + $0xc] sm:$0xf]
      %v176 = vld [vmem:[%s165 + $0x10] sm:$0xf]
      %v177 = vld [vmem:[%s165 + $0x14] sm:$0xf]
      %v178 = vld [vmem:[%s165 + $0x18] sm:$0xf]
      %v179 = vld [vmem:[%s165 + $0x1c] sm:$0xf]
      %v180 = vld [vmem:[%s1] sm:$0xf]
      %v181 = vld [vmem:[%s1 + $0x4] sm:$0xf]
      %v182 = vld [vmem:[%s1 + $0x8] sm:$0xf]
      %v183 = vld [vmem:[%s1 + $0xc] sm:$0xf]
      %v184 = vld [vmem:[%s1 + $0x10] sm:$0x3]
      %v185 = vld [vmem:[%s2] sm:$0x1]
      %v187 = vlaneseq
      %v188 = vshrl.u32 %v187, 7
      %v189 = vsub.s32 0, %v188
      %v190 = vrot.slane %v185, %v189
      %v200 = vunpack.c.l.b16 %v172
      %v201 = vunpack.c.l.b16 %v173
      %v202 = vunpack.c.l.b16 %v174
      %v203 = vunpack.c.l.b16 %v175
      %v204 = vunpack.c.l.b16 %v176
      %v205 = vunpack.c.l.b16 %v177
      %v206 = vunpack.c.l.b16 %v178
      %v207 = vunpack.c.l.b16 %v179
      %v208 = vpack.c.b16 %v201, %v200
      %v209 = vpack.c.b16 %v203, %v202
      %v210 = vpack.c.b16 %v205, %v204
      %v211 = vpack.c.b16 %v207, %v206
      %v217 = vunpack.c.l.b16 %v180
      %v218 = vunpack.c.l.b16 %v181
      %v219 = vunpack.c.l.b16 %v182
      %v220 = vunpack.c.l.b16 %v183
      %v221 = vunpack.c.l.b16 %v184
      %v222 = vpack.c.b16 %v218, %v217
      %v223 = vpack.c.b16 %v220, %v219
      %v224 = vpack.c.b16 %v221, %v221
      %vm227 = vcmask 293888
      %v229 = vsel %vm227, %v208, 0
      %v232 = vsel %vm227, %v209, 0
      %v235 = vsel %vm227, %v210, 0
      %v238 = vsel %vm227, %v211, 0
      %vm240 = vcmask 1041408
      %v242 = vsel %vm240, %v224, 0
      %244 = vmatprep.subr.bf16.mxu0 0
      %245 = vmatpush1.bf16.msra.mxu0 %v222
      %246 = vmatprep.subr.bf16.mxu0 0
      %247 = vmatpush1.bf16.msra.mxu0 %v223
      %248 = vmatprep.subr.bf16.mxu0 0
      %249 = vmatpush1.bf16.msra.mxu0 %v242
      %250 = vmatprep.subr.bf16.mxu0 0
      %251 = vmatpush1.bf16.msra.mxu0 0
      %252 = vmatprep.subr.bf16.mxu0 0
      %253 = vmatpush1.bf16.msra.mxu0 0
      %254 = vmatprep.subr.bf16.mxu0 0
      %255 = vmatpush1.bf16.msra.mxu0 0
      %256 = vmatprep.subr.bf16.mxu0 0
      %257 = vmatpush1.bf16.msra.mxu0 0
      %258 = vmatprep.subr.bf16.mxu0 0
      %259 = vmatpush1.bf16.msra.mxu0 0
      %260 = vmatprep.subr.bf16.mxu0 0
      %261 = vmatpush1.bf16.msra.mxu0 0
      %262 = vmatprep.subr.bf16.mxu0 0
      %263 = vmatpush1.bf16.msra.mxu0 0
      %264 = vmatprep.subr.bf16.mxu0 0
      %265 = vmatpush1.bf16.msra.mxu0 0
      %266 = vmatprep.subr.bf16.mxu0 0
      %267 = vmatpush1.bf16.msra.mxu0 0
      %268 = vmatprep.subr.bf16.mxu0 0
      %269 = vmatpush1.bf16.msra.mxu0 0
      %270 = vmatprep.subr.bf16.mxu0 0
      %271 = vmatpush1.bf16.msra.mxu0 0
      %272 = vmatprep.subr.bf16.mxu0 0
      %273 = vmatpush1.bf16.msra.mxu0 0
      %274 = vmatprep.subr.bf16.mxu0 0
      %275 = vmatpush1.bf16.msra.mxu0 0
      %276 = vmatprep.mubr.bf16.mxu0 0
      %277 = vmatmul.mubr.bf16.gmra.mrb[0].mxu0 %v229
      %v278 = vpop.f32.mrb[0].mxu0
      %v279 = vadd.f32 %v190, %v278
      %v280 = vpop.f32.mrb[0].mxu0
      %v281 = vpop.f32.mrb[0].mxu0
      %v282 = vadd.f32 %v190, %v281
      %v283 = vpop.f32.mrb[0].mxu0
      %284 = vmatprep.mubr.bf16.mxu0 0
      %285 = vmatmul.mubr.bf16.gmra.mrb[0].mxu0 %v232
      %v286 = vpop.f32.mrb[0].mxu0
      %v287 = vadd.f32 %v190, %v286
      %v288 = vpop.f32.mrb[0].mxu0
      %v289 = vpop.f32.mrb[0].mxu0
      %v290 = vadd.f32 %v190, %v289
      %v291 = vpop.f32.mrb[0].mxu0
      %292 = vmatprep.mubr.bf16.mxu0 0
      %293 = vmatmul.mubr.bf16.gmra.mrb[0].mxu0 %v235
      %v294 = vpop.f32.mrb[0].mxu0
      %v295 = vadd.f32 %v190, %v294
      %v296 = vpop.f32.mrb[0].mxu0
      %v297 = vpop.f32.mrb[0].mxu0
      %v298 = vadd.f32 %v190, %v297
      %v299 = vpop.f32.mrb[0].mxu0
      %300 = vmatprep.mubr.bf16.mxu0 0
      %301 = vmatmul.mubr.bf16.gmra.mrb[0].mxu0 %v238
      %v302 = vpop.f32.mrb[0].mxu0
      %v303 = vadd.f32 %v190, %v302
      %v304 = vpop.f32.mrb[0].mxu0
      %v305 = vpop.f32.mrb[0].mxu0
      %v306 = vadd.f32 %v190, %v305
      %v307 = vpop.f32.mrb[0].mxu0
      %308 = vdwg.mxu0
      %v309 = vmax.f32 %v279, 0.0
      %v310 = vmax.f32 %v282, 0.0
      %v311 = vmax.f32 %v287, 0.0
      %v312 = vmax.f32 %v290, 0.0
      %v313 = vmax.f32 %v295, 0.0
      %v314 = vmax.f32 %v298, 0.0
      %v315 = vmax.f32 %v303, 0.0
      %v316 = vmax.f32 %v306, 0.0
      %v317 = vpack.c.bf16 %v310, %v309
      %v318 = vpack.c.bf16 %v312, %v311
      %v319 = vpack.c.bf16 %v314, %v313
      %v320 = vpack.c.bf16 %v316, %v315
      %321 = vst [vmem:[%s170] sm:$0xf] 0
      %322 = vst [vmem:[%s170 + $0x4] sm:$0x1] 0
      %323 = vst [vmem:[%s170 + $0x8] sm:$0xf] 0
      %324 = vst [vmem:[%s170 + $0xc] sm:$0x1] 0
      %325 = vst [vmem:[%s170 + $0x10] sm:$0xf] 0
      %326 = vst [vmem:[%s170 + $0x14] sm:$0x1] 0
      %327 = vst [vmem:[%s170 + $0x18] sm:$0xf] 0
      %328 = vst [vmem:[%s170 + $0x1c] sm:$0x1] 0
      %329 = vst [vmem:[%s170 + $0x20] sm:$0xf] 0
      %330 = vst [vmem:[%s170 + $0x24] sm:$0x1] 0
      %331 = vst [vmem:[%s170 + $0x28] sm:$0xf] 0
      %332 = vst [vmem:[%s170 + $0x2c] sm:$0x1] 0
      %333 = vst [vmem:[%s170 + $0x30] sm:$0xf] 0
      %334 = vst [vmem:[%s170 + $0x34] sm:$0x1] 0
      %335 = vst [vmem:[%s170 + $0x38] sm:$0xf] 0
      %336 = vst [vmem:[%s170 + $0x3c] sm:$0x1] 0
      %337 = vst [vmem:[%s170 + $0x40] sm:$0xf] 0
      %338 = vst [vmem:[%s170 + $0x44] sm:$0x1] 0
      %339 = vst [vmem:[%s170 + $0x48] sm:$0xf] 0
      %340 = vst [vmem:[%s170 + $0x4c] sm:$0x1] 0
      %v345 = vunpack.c.l.b16 %v317
      %v346 = vunpack.c.h.b16 %v317
      %v347 = vunpack.c.l.b16 %v318
      %v348 = vunpack.c.h.b16 %v318
      %v349 = vunpack.c.l.b16 %v319
      %v350 = vunpack.c.h.b16 %v319
      %v351 = vunpack.c.l.b16 %v320
      %v352 = vunpack.c.h.b16 %v320
      %v353 = vpack.c.b16 %v345, %v345
      %v354 = vpack.c.b16 %v346, %v346
      %v355 = vpack.c.b16 %v347, %v347
      %v356 = vpack.c.b16 %v348, %v348
      %v357 = vpack.c.b16 %v349, %v349
      %v358 = vpack.c.b16 %v350, %v350
      %v359 = vpack.c.b16 %v351, %v351
      %v360 = vpack.c.b16 %v352, %v352
      %v362 = vshrl.u32 %v353, 16
      %v364 = vrot.slane %v362, 7
      %v365 = vshll.u32 %v353, 16
      %v367 = vor.u32 %v364, %v365
      %v368 = vrot.slane %v364, 4
      %v370 = vshrl.u32 %v354, 16
      %v372 = vrot.slane %v370, 7
      %v373 = vshll.u32 %v354, 16
      %v375 = vor.u32 %v372, %v373
      %v376 = vrot.slane %v372, 4
      %v378 = vshrl.u32 %v355, 16
      %v380 = vrot.slane %v378, 7
      %v381 = vshll.u32 %v355, 16
      %v383 = vor.u32 %v380, %v381
      %v384 = vrot.slane %v380, 4
      %v386 = vshrl.u32 %v356, 16
      %v388 = vrot.slane %v386, 7
      %v389 = vshll.u32 %v356, 16
      %v391 = vor.u32 %v388, %v389
      %v392 = vrot.slane %v388, 4
      %v394 = vshrl.u32 %v357, 16
      %v396 = vrot.slane %v394, 7
      %v397 = vshll.u32 %v357, 16
      %v399 = vor.u32 %v396, %v397
      %v400 = vrot.slane %v396, 4
      %v402 = vshrl.u32 %v358, 16
      %v404 = vrot.slane %v402, 7
      %v405 = vshll.u32 %v358, 16
      %v407 = vor.u32 %v404, %v405
      %v408 = vrot.slane %v404, 4
      %v410 = vshrl.u32 %v359, 16
      %v412 = vrot.slane %v410, 7
      %v413 = vshll.u32 %v359, 16
      %v415 = vor.u32 %v412, %v413
      %v416 = vrot.slane %v412, 4
      %v418 = vshrl.u32 %v360, 16
      %v420 = vrot.slane %v418, 7
      %v421 = vshll.u32 %v360, 16
      %v423 = vor.u32 %v420, %v421
      %v424 = vrot.slane %v420, 4
      %s441 = scalar_lea.vmem %s170, 8
      %vm442 = vcmask 1043456
      %vm443 = vsmask.f32 7938
      %vm444 = vmand %vm442, %vm443
      %v445 = vld [vmem:[%s441] sm:$0xf]
      %v446 = vsel %vm444, %v367, %v445
      %447 = vst [vmem:[%s441] sm:$0xf] %v446
      %vm448 = vcmask 1040384
      %vm449 = vsmask.f32 256
      %vm450 = vmand %vm448, %vm449
      %v451 = vld [vmem:[%s441 + $0x4] sm:$0x1]
      %v452 = vsel %vm450, %v368, %v451
      %453 = vst [vmem:[%s441 + $0x4] sm:$0x1] %v452
      %v454 = vld [vmem:[%s441 + $0x8] sm:$0xf]
      %v455 = vsel %vm444, %v375, %v454
      %456 = vst [vmem:[%s441 + $0x8] sm:$0xf] %v455
      %v457 = vld [vmem:[%s441 + $0xc] sm:$0x1]
      %v458 = vsel %vm450, %v376, %v457
      %459 = vst [vmem:[%s441 + $0xc] sm:$0x1] %v458
      %v460 = vld [vmem:[%s441 + $0x10] sm:$0xf]
      %v461 = vsel %vm444, %v383, %v460
      %462 = vst [vmem:[%s441 + $0x10] sm:$0xf] %v461
      %v463 = vld [vmem:[%s441 + $0x14] sm:$0x1]
      %v464 = vsel %vm450, %v384, %v463
      %465 = vst [vmem:[%s441 + $0x14] sm:$0x1] %v464
      %v466 = vld [vmem:[%s441 + $0x18] sm:$0xf]
      %v467 = vsel %vm444, %v391, %v466
      %468 = vst [vmem:[%s441 + $0x18] sm:$0xf] %v467
      %v469 = vld [vmem:[%s441 + $0x1c] sm:$0x1]
      %v470 = vsel %vm450, %v392, %v469
      %471 = vst [vmem:[%s441 + $0x1c] sm:$0x1] %v470
      %v472 = vld [vmem:[%s441 + $0x20] sm:$0xf]
      %v473 = vsel %vm444, %v399, %v472
      %474 = vst [vmem:[%s441 + $0x20] sm:$0xf] %v473
      %v475 = vld [vmem:[%s441 + $0x24] sm:$0x1]
      %v476 = vsel %vm450, %v400, %v475
      %477 = vst [vmem:[%s441 + $0x24] sm:$0x1] %v476
      %v478 = vld [vmem:[%s441 + $0x28] sm:$0xf]
      %v479 = vsel %vm444, %v407, %v478
      %480 = vst [vmem:[%s441 + $0x28] sm:$0xf] %v479
      %v481 = vld [vmem:[%s441 + $0x2c] sm:$0x1]
      %v482 = vsel %vm450, %v408, %v481
      %483 = vst [vmem:[%s441 + $0x2c] sm:$0x1] %v482
      %v484 = vld [vmem:[%s441 + $0x30] sm:$0xf]
      %v485 = vsel %vm444, %v415, %v484
      %486 = vst [vmem:[%s441 + $0x30] sm:$0xf] %v485
      %v487 = vld [vmem:[%s441 + $0x34] sm:$0x1]
      %v488 = vsel %vm450, %v416, %v487
      %489 = vst [vmem:[%s441 + $0x34] sm:$0x1] %v488
      %v490 = vld [vmem:[%s441 + $0x38] sm:$0xf]
      %v491 = vsel %vm444, %v423, %v490
      %492 = vst [vmem:[%s441 + $0x38] sm:$0xf] %v491
      %v493 = vld [vmem:[%s441 + $0x3c] sm:$0x1]
      %v494 = vsel %vm450, %v424, %v493
      %495 = vst [vmem:[%s441 + $0x3c] sm:$0x1] %v494
      %p496 = scmp.lt.s32.totalorder %s14, 1
      %s497 = scalar_select %p496, %s14, 1
      %s498 = smul.addr %s497, 20
      %s499 = smul.addr %s498, 4
      %s500 = scalar_lea.vmem %s3, %s499
      // Predicated region
      $region33: #{tpu_custom_call.1} parent=31 // pred_check
        %p501 = pneg %p100
      $region34: #{tpu_custom_call.1} parent=31 // pred_check_branch
        %503 = sbr.rel (%p501) target = $region36
      $region35: #{tpu_custom_call.1} parent=31 // pred_region
        _
      $region36: #{tpu_custom_call.1} parent=31 // pred_fallthru
        _
    $region32: #{tpu_custom_call.1} parent=5 // pred_fallthru
      _
    %p504 = scmp.le.s32.totalorder 2, %s9
    // Predicated region
    $region37: #{tpu_custom_call.1} parent=5 // pred_check
      %p505 = pneg %p504
    $region38: #{tpu_custom_call.1} parent=5 // pred_check_branch
      %507 = sbr.rel (%p505) target = $region40
    $region39: #{tpu_custom_call.1} parent=5 // pred_region
      %s508 = ssub.s32 %s9, 2
      // Predicated region
      $region41: #{tpu_custom_call.1} parent=39 // pred_check
        %p509 = pneg %p106
      $region42: #{tpu_custom_call.1} parent=39 // pred_check_branch
        %511 = sbr.rel (%p509) target = $region44
      $region43: #{tpu_custom_call.1} parent=39 // pred_region
        %p512 = scmp.lt.s32.totalorder %s15, 1
        %s513 = scalar_select %p512, %s15, 1
        %s514 = smul.addr %s513, 20
        %s515 = smul.addr %s514, 4
        %s516 = scalar_lea.vmem %s3, %s515
      $region44: #{tpu_custom_call.1} parent=39 // pred_fallthru
        _
    $region40: #{tpu_custom_call.1} parent=5 // pred_fallthru
      _
  $region6: #{tpu_custom_call.1} parent=0 // loop_footer
    %s13 = sadd.s32 1, %s9
  $region7: #{tpu_custom_call.1} parent=0 // loop_footer_branch
    %8 = sbr.rel target = $region3
  $region8: #{tpu_custom_call.1} parent=0 // loop_exit
    _

</llo_original>
